<compile_context>
chip_gen: v5e
topology: v5e:2x2
jax: 0.10.0
libtpu: 0.0.40
codegen_flags: <defaults>
</compile_context>

<pallas_src>
import functools

import jax
import jax.numpy as jnp
from jax import lax
from jax.experimental import pallas as pl
from jax.experimental.pallas import tpu as pltpu


def _cdiv(a, b):
    return (a + b - 1) // b


def _round_up(n, m):
    return ((n + m - 1) // m) * m


def _mlp_kernel(n_layers, *refs):
    """Fused MLP forward.  refs = (x_ref, *param_refs, out_ref).

    x_ref:          [tile_b, d_in]            natural batch-major block
    hidden params:  w [out, in], b [out, 1]   (batch-on-lanes after layer 1)
    final params:   w [in, 1],  b [1, 1]
    out_ref:        [1, tile_b]               lane-dense output block
    """
    x_ref = refs[0]
    out_ref = refs[-1]
    p = refs[1:-1]

    x = x_ref[...]                                        # [tile_b, d_in] f32

    if n_layers == 0:
        # Single linear layer with identity activation: w [1, d_in], b [1, 1].
        w, b = p[0][...], p[1][...]
        out_ref[...] = lax.dot_general(
            w, x, (((1,), (1,)), ((), ())),
            preferred_element_type=jnp.float32) + b
        return

    # Layer 1: contract over d_in (the minor dim of BOTH operands, i.e. the
    # standard attention A @ B^T pattern).  Result is [size, tile_b]: the batch
    # lands on the lane axis with no explicit transpose of x in HBM or VMEM.
    h = lax.dot_general(p[0][...], x, (((1,), (1,)), ((), ())),
                        preferred_element_type=jnp.float32)
    h = jnp.maximum(h + p[1][...], 0.0)                   # bias bcast along lanes

    # Remaining hidden layers: standard [out,in] @ [in,tile_b] MXU matmuls,
    # bias broadcast along lanes (cheap direction), ReLU on the VPU.
    for layer in range(1, n_layers):
        w, b = p[2 * layer][...], p[2 * layer + 1][...]
        h = jnp.dot(w, h, preferred_element_type=jnp.float32)
        h = jnp.maximum(h + b, 0.0)

    # Output Linear(1): VPU broadcast-multiply + XLU sublane sum instead of a
    # wasteful 1-row MXU tile.  w_out [size, 1], b_out [1, 1].
    w_out, b_out = p[2 * n_layers][...], p[2 * n_layers + 1][...]
    out_ref[...] = jnp.sum(h * w_out, axis=0, keepdims=True) + b_out


def prepare_cost_nn_params(params, n_layers):
    """One-time re-layout of PyTorch-style params (w [in,out], b [1,out]).

    Hidden layers -> (w [out,in], b [out,1]); the final Linear(1) is kept as
    (w [in,1], b [1,1]) so the kernel evaluates it on the VPU.  Call this once
    per parameter update, NOT per forward call.
    """
    prepared = []
    for i in range(n_layers + 1):
        w = jnp.asarray(params[2 * i], jnp.float32)
        b = jnp.asarray(params[2 * i + 1], jnp.float32)
        if n_layers == 0 or i < n_layers:
            prepared.append(w.T)                 # [out, in]
            prepared.append(b.reshape(-1, 1))    # [out, 1]
        else:
            prepared.append(w.reshape(-1, 1))    # [in, 1]   (out_features == 1)
            prepared.append(b.reshape(1, 1))     # [1, 1]
    return prepared


def cost_nn_forward(x, prepared_params, *, n_layers, tile_b=8192):
    """Run the CostNN MLP forward via a single pallas_call.

    x:                [B, D_in] float32 (concat([obs, action], -1), as in CostNN)
    prepared_params:  output of prepare_cost_nn_params()
    returns:          [B, 1] float32
    """
    B, d_in = x.shape
    x = x.astype(jnp.float32)

    # tile_b choice:
    #  * cap at 8192: double-buffered x tiles + f32 intermediates stay well
    #    under even v5e's 16 MiB default scoped-VMEM limit,
    #  * keep >= 2 grid steps when the batch allows it so the "parallel" axis
    #    can be split across v7x's 2 TensorCores,
    #  * floor at 128 (lane width).  No padding of x: the grid is cdiv(B,
    #    tile_b) and the trailing partial block is masked by Pallas.
    tile_b = max(128, min(min(tile_b, 8192), _round_up(_cdiv(B, 2), 128)))
    grid = (_cdiv(B, tile_b),)

    x_spec = pl.BlockSpec((tile_b, d_in), lambda i: (i, 0))
    param_specs = [pl.BlockSpec(p.shape, lambda i: (0, 0)) for p in prepared_params]
    out_spec = pl.BlockSpec((1, tile_b), lambda i: (0, i))

    # Advisory cost estimate: tiny-FLOP, HBM/launch-overhead-bound op.
    flops = sum(2 * B * prepared_params[i].size
                for i in range(0, len(prepared_params), 2))
    param_bytes = sum(p.size * 4 for p in prepared_params)
    bytes_accessed = B * d_in * 4 + B * 4 + param_bytes

    out = pl.pallas_call(
        functools.partial(_mlp_kernel, n_layers),
        out_shape=jax.ShapeDtypeStruct((1, B), jnp.float32),
        grid_spec=pltpu.PrefetchScalarGridSpec(
            num_scalar_prefetch=0,
            grid=grid,
            in_specs=[x_spec] + param_specs,
            out_specs=out_spec,
        ),
        compiler_params=pltpu.CompilerParams(
            dimension_semantics=("parallel",),
        ),
        cost_estimate=pl.CostEstimate(
            flops=flops, transcendentals=0, bytes_accessed=bytes_accessed),
    )(x, *prepared_params)

    # [1, B] -> [B, 1]: same row-major element order, so this is a cheap reshape.
    return out.reshape(B, 1)


def init_cost_nn_params(key, ob_dim, action_shape, n_layers, size):
    """Deterministic init mimicking PyTorch nn.Linear default (U(-1/sqrt(fan_in), ..))."""
    in_size = ob_dim + action_shape
    dims = [in_size] + [size] * n_layers + [1]
    params = []
    for i in range(len(dims) - 1):
        fan_in, fan_out = dims[i], dims[i + 1]
        key, kw, kb = jax.random.split(key, 3)
        bound = 1.0 / jnp.sqrt(jnp.float32(fan_in))
        w = jax.random.uniform(kw, (fan_in, fan_out), jnp.float32, -bound, bound)
        b = jax.random.uniform(kb, (1, fan_out), jnp.float32, -bound, bound)
        params += [w, b]
    return params


def cost_nn_reference(x, params, n_layers):
    """Pure-JAX reference (PyTorch-layout params) for correctness checking."""
    h = x
    for layer in range(n_layers + 1):
        w, b = params[2 * layer], params[2 * layer + 1]
        h = h @ w + b
        if layer < n_layers:
            h = jnp.maximum(h, 0.0)
    return h


if __name__ == "__main__":
    # Small shapes consistent with CostNN: ob_dim=4, action_shape=1,
    # n_layers=2 hidden layers of width 32, output dim 1.
    ob_dim = 4
    action_shape = 1
    n_layers = 2
    size = 32

    key = jax.random.PRNGKey(0)
    params = init_cost_nn_params(key, ob_dim, action_shape, n_layers, size)
    prepared = prepare_cost_nn_params(params, n_layers)   # hoisted, one-time

    # Batches: < one tile, ragged < one tile, and ragged multi-tile (grid of 2).
    for batch in (16, 37, 300):
        key, kx = jax.random.split(key)
        x = jax.random.normal(kx, (batch, ob_dim + action_shape), jnp.float32)

        out = cost_nn_forward(x, prepared, n_layers=n_layers)
        out = jax.block_until_ready(out)

        ref = cost_nn_reference(x, params, n_layers)
        assert out.shape == (batch, 1), out.shape
        assert jnp.allclose(out, ref, atol=1e-5, rtol=1e-5), "mismatch vs reference"

    print("KERNEL_OK")
</pallas_src>

<mosaic_0001>
module attributes {stable_mosaic.version = 11 : i64} {
  func.func @_mlp_kernel(%arg0: i32, %arg1: memref<128x5xf32, #tpu.memory_space<vmem>>, %arg2: memref<32x5xf32, #tpu.memory_space<vmem>>, %arg3: memref<32x1xf32, #tpu.memory_space<vmem>>, %arg4: memref<32x32xf32, #tpu.memory_space<vmem>>, %arg5: memref<32x1xf32, #tpu.memory_space<vmem>>, %arg6: memref<32x1xf32, #tpu.memory_space<vmem>>, %arg7: memref<1x1xf32, #tpu.memory_space<vmem>>, %arg8: memref<1x128xf32, #tpu.memory_space<vmem>>) attributes {dimension_semantics = [#tpu.dimension_semantics<parallel>], iteration_bounds = array<i64: 1>, scalar_prefetch = 0 : i64, scratch_operands = 0 : i64, tpu.core_type = #tpu.core_type<tc>, window_params = [{transform_indices = @transform_0, window_bounds = array<i64: 128, 5>}, {pipeline_mode = #tpu.pipeline_mode<synchronous>, transform_indices = @transform_1, window_bounds = array<i64: 32, 5>}, {pipeline_mode = #tpu.pipeline_mode<synchronous>, transform_indices = @transform_2, window_bounds = array<i64: 32, 1>}, {pipeline_mode = #tpu.pipeline_mode<synchronous>, transform_indices = @transform_3, window_bounds = array<i64: 32, 32>}, {pipeline_mode = #tpu.pipeline_mode<synchronous>, transform_indices = @transform_4, window_bounds = array<i64: 32, 1>}, {pipeline_mode = #tpu.pipeline_mode<synchronous>, transform_indices = @transform_5, window_bounds = array<i64: 32, 1>}, {pipeline_mode = #tpu.pipeline_mode<synchronous>, transform_indices = @transform_6, window_bounds = array<i64: 1, 1>}, {transform_indices = @transform_7, window_bounds = array<i64: 1, 128>}]} {
    %c0 = arith.constant 0 : index
    %c0_0 = arith.constant 0 : index
    %0 = vector.load %arg1[%c0, %c0_0] : memref<128x5xf32, #tpu.memory_space<vmem>>, vector<128x5xf32>
    %c0_1 = arith.constant 0 : index
    %c0_2 = arith.constant 0 : index
    %1 = vector.load %arg2[%c0_1, %c0_2] : memref<32x5xf32, #tpu.memory_space<vmem>>, vector<32x5xf32>
    %cst = arith.constant dense<0.000000e+00> : vector<32x128xf32>
    %2 = tpu.matmul %1, %0, %cst {dimension_numbers = #tpu.dot_dimension_numbers<[1], [1], [0], [0], [0, 0, 1, 0], [], []>} : vector<32x5xf32>, vector<128x5xf32>, vector<32x128xf32> -> vector<32x128xf32>
    %c0_3 = arith.constant 0 : index
    %c0_4 = arith.constant 0 : index
    %3 = vector.load %arg3[%c0_3, %c0_4] : memref<32x1xf32, #tpu.memory_space<vmem>>, vector<32x1xf32>
    %4 = vector.broadcast %3 : vector<32x1xf32> to vector<32x128xf32>
    %5 = arith.addf %2, %4 : vector<32x128xf32>
    %cst_5 = arith.constant 0.000000e+00 : f32
    %6 = vector.broadcast %cst_5 : f32 to vector<32x128xf32>
    %7 = arith.maximumf %5, %6 : vector<32x128xf32>
    %c0_6 = arith.constant 0 : index
    %c0_7 = arith.constant 0 : index
    %8 = vector.load %arg4[%c0_6, %c0_7] : memref<32x32xf32, #tpu.memory_space<vmem>>, vector<32x32xf32>
    %c0_8 = arith.constant 0 : index
    %c0_9 = arith.constant 0 : index
    %9 = vector.load %arg5[%c0_8, %c0_9] : memref<32x1xf32, #tpu.memory_space<vmem>>, vector<32x1xf32>
    %cst_10 = arith.constant dense<0.000000e+00> : vector<32x128xf32>
    %10 = tpu.matmul %8, %7, %cst_10 {dimension_numbers = #tpu.dot_dimension_numbers<[1], [0], [0], [1], [0, 0, 1, 1], [], []>} : vector<32x32xf32>, vector<32x128xf32>, vector<32x128xf32> -> vector<32x128xf32>
    %11 = vector.broadcast %9 : vector<32x1xf32> to vector<32x128xf32>
    %12 = arith.addf %10, %11 : vector<32x128xf32>
    %cst_11 = arith.constant 0.000000e+00 : f32
    %13 = vector.broadcast %cst_11 : f32 to vector<32x128xf32>
    %14 = arith.maximumf %12, %13 : vector<32x128xf32>
    %c0_12 = arith.constant 0 : index
    %c0_13 = arith.constant 0 : index
    %15 = vector.load %arg6[%c0_12, %c0_13] : memref<32x1xf32, #tpu.memory_space<vmem>>, vector<32x1xf32>
    %c0_14 = arith.constant 0 : index
    %c0_15 = arith.constant 0 : index
    %16 = vector.load %arg7[%c0_14, %c0_15] : memref<1x1xf32, #tpu.memory_space<vmem>>, vector<1x1xf32>
    %17 = vector.broadcast %15 : vector<32x1xf32> to vector<32x128xf32>
    %18 = arith.mulf %14, %17 : vector<32x128xf32>
    %cst_16 = arith.constant dense<0.000000e+00> : vector<128xf32>
    %19 = vector.multi_reduction <add>, %18, %cst_16 [0] : vector<32x128xf32> to vector<128xf32>
    %20 = vector.shape_cast %19 : vector<128xf32> to vector<1x128xf32>
    %21 = vector.broadcast %16 : vector<1x1xf32> to vector<1x128xf32>
    %22 = arith.addf %20, %21 : vector<1x128xf32>
    %c0_17 = arith.constant 0 : index
    %c0_18 = arith.constant 0 : index
    %23 = vector.load %arg8[%c0_17, %c0_18] : memref<1x128xf32, #tpu.memory_space<vmem>>, vector<1x128xf32>
    tpu.vector_store %arg8[%c0_17, %c0_18], %22 {strides = array<i32>} : memref<1x128xf32, #tpu.memory_space<vmem>>, vector<1x128xf32>,
    return
  }
  func.func @transform_0(%arg0: i32) -> (i32, i32) {
    %c0_i32 = arith.constant 0 : i32
    %c0_i32_0 = arith.constant 0 : i32
    return %arg0, %c0_i32 : i32, i32
  }
  func.func @transform_1(%arg0: i32) -> (i32, i32) {
    %c0_i32 = arith.constant 0 : i32
    %c0_i32_0 = arith.constant 0 : i32
    %c0_i32_1 = arith.constant 0 : i32
    return %c0_i32, %c0_i32_0 : i32, i32
  }
  func.func @transform_2(%arg0: i32) -> (i32, i32) {
    %c0_i32 = arith.constant 0 : i32
    %c0_i32_0 = arith.constant 0 : i32
    %c0_i32_1 = arith.constant 0 : i32
    return %c0_i32, %c0_i32_0 : i32, i32
  }
  func.func @transform_3(%arg0: i32) -> (i32, i32) {
    %c0_i32 = arith.constant 0 : i32
    %c0_i32_0 = arith.constant 0 : i32
    %c0_i32_1 = arith.constant 0 : i32
    return %c0_i32, %c0_i32_0 : i32, i32
  }
  func.func @transform_4(%arg0: i32) -> (i32, i32) {
    %c0_i32 = arith.constant 0 : i32
    %c0_i32_0 = arith.constant 0 : i32
    %c0_i32_1 = arith.constant 0 : i32
    return %c0_i32, %c0_i32_0 : i32, i32
  }
  func.func @transform_5(%arg0: i32) -> (i32, i32) {
    %c0_i32 = arith.constant 0 : i32
    %c0_i32_0 = arith.constant 0 : i32
    %c0_i32_1 = arith.constant 0 : i32
    return %c0_i32, %c0_i32_0 : i32, i32
  }
  func.func @transform_6(%arg0: i32) -> (i32, i32) {
    %c0_i32 = arith.constant 0 : i32
    %c0_i32_0 = arith.constant 0 : i32
    %c0_i32_1 = arith.constant 0 : i32
    return %c0_i32, %c0_i32_0 : i32, i32
  }
  func.func @transform_7(%arg0: i32) -> (i32, i32) {
    %c0_i32 = arith.constant 0 : i32
    %c0_i32_0 = arith.constant 0 : i32
    return %c0_i32, %arg0 : i32, i32
  }
}

</mosaic_0001>

<llo_original>
// kernel: tpu_custom_call.1
$region0: #{tpu_custom_call.1}
  #allocation0 [shape = 'u32[]', space=smem, size = 0x4, offset = 0x4, fixed_abs, tag = 'smem constant byte address 0x4 - core index']
  #allocation1 [shape = 'u32[72,128]{1,0:T(1,128)}', space=vmem, size = 0x9000, scoped, tag = 'internal scratch']
  #allocation2 [shape = 'f32[1,1]{1,0:T(1,128)S(1)}', space=vmem, size = 0x200, scoped, tag = 'scoped memory for tpu_custom_call.1']
  %s0 = inlined_call_operand.vmem [shape: f32[16,5], index: 0, kind: input, shape index: {}]
  %s1 = inlined_call_operand.vmem [shape: f32[32,5], index: 1, kind: input, shape index: {}]
  %s2 = inlined_call_operand.vmem [shape: f32[32,1], index: 2, kind: input, shape index: {}]
  %s3 = inlined_call_operand.vmem [shape: f32[32,32], index: 3, kind: input, shape index: {}]
  %s4 = inlined_call_operand.vmem [shape: f32[32,1], index: 4, kind: input, shape index: {}]
  %s5 = inlined_call_operand.vmem [shape: f32[32,1], index: 5, kind: input, shape index: {}]
  %s6 = inlined_call_operand.<no memory space> [shape: f32[1,1], index: 6, kind: input, shape index: {}]
  %s7 = inlined_call_operand.hbm [shape: f32[1,16], index: 7, kind: output, shape index: {}]
  %s8 = sld [smem:[#allocation0]]
  $region38: #{tpu_custom_call.1} parent=0
    _
  %s10 = ssub.s32 1, %s8
  %s11 = scalar_select 0, %s10, %s8
  %v12 = vstv %s6
  %13 = vst [vmem:[#allocation2] sm:$0x1] %v12
  $region1: #{tpu_custom_call.1} parent=0
    #allocation3 [shape = 'u8[512]{0}', space=vmem, size = 0x400, scoped, tag = 'output window, operand 0, single buffered']
    #allocation4 [shape = 's32[1]{0}', space=sflag, size = 0x4, scoped, tag = 'scoped memory for tpu_custom_call.1']
    %14 = vsyncpa [#allocation4], 0
    // Predicated region
    $region2: #{tpu_custom_call.1} parent=1 // pred_check
      _
    $region3: #{tpu_custom_call.1} parent=1 // pred_check_branch
      %16 = sbr.rel (0) target = $region5
    $region4: #{tpu_custom_call.1} parent=1 // pred_region
      _
    $region5: #{tpu_custom_call.1} parent=1 // pred_fallthru
      _
    // Predicated region
    $region6: #{tpu_custom_call.1} parent=1 // pred_check
      _
    $region7: #{tpu_custom_call.1} parent=1 // pred_check_branch
      %18 = sbr.rel (0) target = $region9
    $region8: #{tpu_custom_call.1} parent=1 // pred_region
      _
    $region9: #{tpu_custom_call.1} parent=1 // pred_fallthru
      _
    // Predicated region
    $region10: #{tpu_custom_call.1} parent=1 // pred_check
      _
    $region11: #{tpu_custom_call.1} parent=1 // pred_check_branch
      %20 = sbr.rel (0) target = $region13
    $region12: #{tpu_custom_call.1} parent=1 // pred_region
      _
    $region13: #{tpu_custom_call.1} parent=1 // pred_fallthru
      _
    // Predicated region
    $region14: #{tpu_custom_call.1} parent=1 // pred_check
      _
    $region15: #{tpu_custom_call.1} parent=1 // pred_check_branch
      %22 = sbr.rel (0) target = $region17
    $region16: #{tpu_custom_call.1} parent=1 // pred_region
      _
    $region17: #{tpu_custom_call.1} parent=1 // pred_fallthru
      _
    // Predicated region
    $region18: #{tpu_custom_call.1} parent=1 // pred_check
      _
    $region19: #{tpu_custom_call.1} parent=1 // pred_check_branch
      %24 = sbr.rel (0) target = $region21
    $region20: #{tpu_custom_call.1} parent=1 // pred_region
      _
    $region21: #{tpu_custom_call.1} parent=1 // pred_fallthru
      _
    // Predicated region
    $region22: #{tpu_custom_call.1} parent=1 // pred_check
      _
    $region23: #{tpu_custom_call.1} parent=1 // pred_check_branch
      %26 = sbr.rel (0) target = $region25
    $region24: #{tpu_custom_call.1} parent=1 // pred_region
      _
    $region25: #{tpu_custom_call.1} parent=1 // pred_fallthru
      _
    // Predicated region
    $region26: #{tpu_custom_call.1} parent=1 // pred_check
      _
    $region27: #{tpu_custom_call.1} parent=1 // pred_check_branch
      %28 = sbr.rel (0) target = $region29
    $region28: #{tpu_custom_call.1} parent=1 // pred_region
      _
    $region29: #{tpu_custom_call.1} parent=1 // pred_fallthru
      _
    %v29 = vld [vmem:[%s0] sm:$0xff]
    %v30 = vld [vmem:[%s0 + $0x8] sm:$0xff]
    %v31 = vld [vmem:[%s0 + $0x10] sm:$0xff]
    %v32 = vld [vmem:[%s0 + $0x18] sm:$0xff]
    %v33 = vld [vmem:[%s0 + $0x20] sm:$0xff]
    %v34 = vld [vmem:[%s0 + $0x28] sm:$0xff]
    %v35 = vld [vmem:[%s0 + $0x30] sm:$0xff]
    %v36 = vld [vmem:[%s0 + $0x38] sm:$0xff]
    %v37 = vld [vmem:[%s0 + $0x40] sm:$0xff]
    %v38 = vld [vmem:[%s0 + $0x48] sm:$0xff]
    %v39 = vld [vmem:[%s0 + $0x50] sm:$0xff]
    %v40 = vld [vmem:[%s0 + $0x58] sm:$0xff]
    %v41 = vld [vmem:[%s0 + $0x60] sm:$0xff]
    %v42 = vld [vmem:[%s0 + $0x68] sm:$0xff]
    %v43 = vld [vmem:[%s0 + $0x70] sm:$0xff]
    %v44 = vld [vmem:[%s0 + $0x78] sm:$0xff]
    %v45 = vld [vmem:[%s1] sm:$0xff]
    %v46 = vld [vmem:[%s1 + $0x8] sm:$0xff]
    %v47 = vld [vmem:[%s1 + $0x10] sm:$0xff]
    %v48 = vld [vmem:[%s1 + $0x18] sm:$0xff]
    %v49 = vld [vmem:[%s2] sm:$0xff]
    %v50 = vld [vmem:[%s2 + $0x8] sm:$0xff]
    %v51 = vld [vmem:[%s2 + $0x10] sm:$0xff]
    %v52 = vld [vmem:[%s2 + $0x18] sm:$0xff]
    %54 = vset.pattern.permute.xlu0 0
    %55 = vperm.xlu0 %54, %v49
    %v56 = vpop.permute.xlu0 %55
    %59 = vset.pattern.permute.xlu0 0
    %60 = vperm.xlu0 %59, %v50
    %v61 = vpop.permute.xlu0 %60
    %64 = vset.pattern.permute.xlu0 0
    %65 = vperm.xlu0 %64, %v51
    %v66 = vpop.permute.xlu0 %65
    %69 = vset.pattern.permute.xlu0 0
    %70 = vperm.xlu0 %69, %v52
    %v71 = vpop.permute.xlu0 %70
    %vm73 = vcmask 39936
    %v75 = vsel %vm73, %v45, 0
    %v78 = vsel %vm73, %v46, 0
    %v81 = vsel %vm73, %v47, 0
    %v84 = vsel %vm73, %v48, 0
    %v87 = vsel %vm73, %v29, 0
    %v90 = vsel %vm73, %v30, 0
    %v93 = vsel %vm73, %v31, 0
    %v96 = vsel %vm73, %v32, 0
    %v99 = vsel %vm73, %v33, 0
    %v102 = vsel %vm73, %v34, 0
    %v105 = vsel %vm73, %v35, 0
    %v108 = vsel %vm73, %v36, 0
    %v111 = vsel %vm73, %v37, 0
    %v114 = vsel %vm73, %v38, 0
    %v117 = vsel %vm73, %v39, 0
    %v120 = vsel %vm73, %v40, 0
    %v123 = vsel %vm73, %v41, 0
    %v126 = vsel %vm73, %v42, 0
    %v129 = vsel %vm73, %v43, 0
    %v132 = vsel %vm73, %v44, 0
    %134 = vmatpush.xpose.msra.mxu0 %v132
    %135 = vmatpush.xpose.msra.mxu0 %v129
    %136 = vmatpush.xpose.msra.mxu0 %v126
    %137 = vmatpush.xpose.msra.mxu0 %v123
    %138 = vmatpush.xpose.msra.mxu0 %v120
    %139 = vmatpush.xpose.msra.mxu0 %v117
    %140 = vmatpush.xpose.msra.mxu0 %v114
    %141 = vmatpush.xpose.msra.mxu0 %v111
    %142 = vmatpush.xpose.msra.mxu0 %v108
    %143 = vmatpush.xpose.msra.mxu0 %v105
    %144 = vmatpush.xpose.msra.mxu0 %v102
    %145 = vmatpush.xpose.msra.mxu0 %v99
    %146 = vmatpush.xpose.msra.mxu0 %v96
    %147 = vmatpush.xpose.msra.mxu0 %v93
    %148 = vmatpush.xpose.msra.mxu0 %v90
    %149 = vmatpush.xpose.msra.mxu0 %v87
    %150 = vmatmul.f32.gmra.mxu0 %v75
    %v151 = vpop.f32.mrf.mxu0
    %v152 = vadd.f32 %v56, %v151
    %153 = vmatmul.f32.gmra.mxu0 %v78
    %v154 = vpop.f32.mrf.mxu0
    %v155 = vadd.f32 %v61, %v154
    %156 = vmatmul.f32.gmra.mxu0 %v81
    %v157 = vpop.f32.mrf.mxu0
    %v158 = vadd.f32 %v66, %v157
    %159 = vmatmul.f32.gmra.mxu0 %v84
    %v160 = vpop.f32.mrf.mxu0
    %v161 = vadd.f32 %v71, %v160
    %162 = vdwg.mxu0
    %v163 = vmax.f32 %v152, 0.0
    %v164 = vmax.f32 %v155, 0.0
    %v165 = vmax.f32 %v158, 0.0
    %v166 = vmax.f32 %v161, 0.0
    %v167 = vld [vmem:[%s3] sm:$0xff]
    %v168 = vld [vmem:[%s3 + $0x8] sm:$0xff]
    %v169 = vld [vmem:[%s3 + $0x10] sm:$0xff]
    %v170 = vld [vmem:[%s3 + $0x18] sm:$0xff]
    %v171 = vld [vmem:[%s4] sm:$0xff]
    %v172 = vld [vmem:[%s4 + $0x8] sm:$0xff]
    %v173 = vld [vmem:[%s4 + $0x10] sm:$0xff]
    %v174 = vld [vmem:[%s4 + $0x18] sm:$0xff]
    %176 = vset.pattern.permute.xlu0 0
    %177 = vperm.xlu0 %176, %v171
    %v178 = vpop.permute.xlu0 %177
    %181 = vset.pattern.permute.xlu0 0
    %182 = vperm.xlu0 %181, %v172
    %v183 = vpop.permute.xlu0 %182
    %186 = vset.pattern.permute.xlu0 0
    %187 = vperm.xlu0 %186, %v173
    %v188 = vpop.permute.xlu0 %187
    %191 = vset.pattern.permute.xlu0 0
    %192 = vperm.xlu0 %191, %v174
    %v193 = vpop.permute.xlu0 %192
    %vm195 = vcmask 261120
    %v197 = vsel %vm195, %v167, 0
    %v200 = vsel %vm195, %v168, 0
    %v203 = vsel %vm195, %v169, 0
    %v206 = vsel %vm195, %v170, 0
    %208 = vmatpush.msra.mxu0 0.0
    %209 = vmatpush.msra.mxu0 0.0
    %210 = vmatpush.msra.mxu0 0.0
    %211 = vmatpush.msra.mxu0 0.0
    %212 = vmatpush.msra.mxu0 0.0
    %213 = vmatpush.msra.mxu0 0.0
    %214 = vmatpush.msra.mxu0 0.0
    %215 = vmatpush.msra.mxu0 0.0
    %216 = vmatpush.msra.mxu0 0.0
    %217 = vmatpush.msra.mxu0 0.0
    %218 = vmatpush.msra.mxu0 0.0
    %219 = vmatpush.msra.mxu0 0.0
    %220 = vmatpush.msra.mxu0 %v166
    %221 = vmatpush.msra.mxu0 %v165
    %222 = vmatpush.msra.mxu0 %v164
    %223 = vmatpush.msra.mxu0 %v163
    %224 = vmatmul.f32.gmra.mxu0 %v197
    %v225 = vpop.f32.mrf.mxu0
    %v226 = vadd.f32 %v178, %v225
    %227 = vmatmul.f32.gmra.mxu0 %v200
    %v228 = vpop.f32.mrf.mxu0
    %v229 = vadd.f32 %v183, %v228
    %230 = vmatmul.f32.gmra.mxu0 %v203
    %v231 = vpop.f32.mrf.mxu0
    %v232 = vadd.f32 %v188, %v231
    %233 = vmatmul.f32.gmra.mxu0 %v206
    %v234 = vpop.f32.mrf.mxu0
    %v235 = vadd.f32 %v193, %v234
    %236 = vdwg.mxu0
    %v237 = vmax.f32 %v226, 0.0
    %v238 = vmax.f32 %v229, 0.0
    %v239 = vmax.f32 %v232, 0.0
    %v240 = vmax.f32 %v235, 0.0
    %v241 = vld [vmem:[%s5] sm:$0xff]
    %v242 = vld [vmem:[%s5 + $0x8] sm:$0xff]
    %v243 = vld [vmem:[%s5 + $0x10] sm:$0xff]
    %v244 = vld [vmem:[%s5 + $0x18] sm:$0xff]
    %v245 = vld [vmem:[#allocation2] sm:$0x1]
    %247 = vset.pattern.permute.xlu0 0
    %248 = vperm.xlu0 %247, %v241
    %v249 = vpop.permute.xlu0 %248
    %252 = vset.pattern.permute.xlu0 0
    %253 = vperm.xlu0 %252, %v242
    %v254 = vpop.permute.xlu0 %253
    %257 = vset.pattern.permute.xlu0 0
    %258 = vperm.xlu0 %257, %v243
    %v259 = vpop.permute.xlu0 %258
    %262 = vset.pattern.permute.xlu0 0
    %263 = vperm.xlu0 %262, %v244
    %v264 = vpop.permute.xlu0 %263
    %v266 = vmul.f32 %v237, %v249
    %v267 = vmul.f32 %v238, %v254
    %v268 = vmul.f32 %v239, %v259
    %v269 = vmul.f32 %v240, %v264
    %v270 = vadd.f32 %v266, %v267
    %v271 = vadd.f32 %v270, %v268
    %v272 = vadd.f32 %v271, %v269
    %v273 = vrot.slane %v272, 4
    %v274 = vadd.f32 %v272, %v273
    %v275 = vrot.slane %v274, 2
    %v276 = vadd.f32 %v274, %v275
    %v277 = vrot.slane %v276, 1
    %v278 = vadd.f32 %v276, %v277
    %280 = vset.pattern.permute.xlu0 0
    %281 = vperm.xlu0 %280, %v245
    %v282 = vpop.permute.xlu0 %281
    %v284 = vperm.slane %v282, 0
    %v285 = vadd.f32 %v278, %v284
    %286 = vst [vmem:[#allocation3] sm:$0x1] %v285
    // Predicated region
    $region30: #{tpu_custom_call.1} parent=1 // pred_check
      _
    $region31: #{tpu_custom_call.1} parent=1 // pred_check_branch
      %288 = sbr.rel (0) target = $region33
    $region32: #{tpu_custom_call.1} parent=1 // pred_region
      %290 = vsyncadd [#allocation4], 0
      %s292 = sshll.u32 [#allocation3], 4
      %s293 = int_to_ptr.vmem [resolvable:$true] %s292
      %s294 = sshll.u32 %s7, 4
      %s295 = int_to_ptr.hbm [resolvable:$true] %s294
      %297 = dma.vmem_to_hbm [thread:$0]  %s293, 16, %s295, [#allocation4]
    $region33: #{tpu_custom_call.1} parent=1 // pred_fallthru
      _
    // Predicated region
    $region34: #{tpu_custom_call.1} parent=1 // pred_check
      _
    $region35: #{tpu_custom_call.1} parent=1 // pred_check_branch
      %299 = sbr.rel (0) target = $region37
    $region36: #{tpu_custom_call.1} parent=1 // pred_region
      %301 = dma.done [#allocation4], 16
    $region37: #{tpu_custom_call.1} parent=1 // pred_fallthru
      _
    %302 = vsyncpa [#allocation4], 1

</llo_original>
